<compile_context>
chip_gen: v7x
topology: tpu7x:2x2x1
jax: 0.10.0
libtpu: 0.0.40
codegen_flags: <defaults>
</compile_context>

<pallas_src>
import numpy as np
import jax
import jax.numpy as jnp
from jax.experimental import pallas as pl
from jax.experimental.pallas import tpu as pltpu


_LANE = 128
_DEFAULT_BLOCK_BYTES = 4 * 1024 * 1024  # ~4 MiB per block / DMA chunk


def squeeze_view(x: jax.Array) -> jax.Array:
    """Zero-cost squeeze (metadata-only reshape; what you want in practice)."""
    return jnp.reshape(x, tuple(d for d in x.shape if d != 1))


# ----------------------------------------------------------------------------
# Aligned fast path: lane-dense BlockSpec-pipelined copy.
# ----------------------------------------------------------------------------
def _copy_block_kernel(x_ref, o_ref):
    # Pure data movement: one lane-dense (tr, 128) slab per grid step.
    o_ref[...] = x_ref[...]


def _aligned_copy(x1, total, itemsize, block_bytes):
    """Copy a 1-D array whose length is a multiple of 128.

    Returns None if an exact (non-ragged) tiling is not possible, in which
    case the caller uses the general DMA path instead.
    """
    rows = total // _LANE
    # Dtype-aware row tile: tr * 128 * itemsize ~= block_bytes, multiple of 8.
    tr_target = max(8, (block_bytes // (_LANE * itemsize)) // 8 * 8)

    if rows <= tr_target:
        tr = rows                      # single full-array block (always legal)
    elif rows % tr_target == 0:
        tr = tr_target                 # exact tiling, no ragged edge blocks
    else:
        return None                    # fall back to the manual-DMA path

    n_blocks = rows // tr
    x2 = jnp.reshape(x1, (rows, _LANE))          # metadata-only reshape
    cost = pl.CostEstimate(flops=0, transcendentals=0,
                           bytes_accessed=2 * total * itemsize)

    out2 = pl.pallas_call(
        _copy_block_kernel,
        out_shape=jax.ShapeDtypeStruct((rows, _LANE), x1.dtype),
        grid_spec=pltpu.PrefetchScalarGridSpec(
            num_scalar_prefetch=0,
            grid=(n_blocks,),
            in_specs=[pl.BlockSpec((tr, _LANE), lambda i: (i, 0))],
            out_specs=pl.BlockSpec((tr, _LANE), lambda i: (i, 0)),
        ),
        compiler_params=pltpu.CompilerParams(
            dimension_semantics=("parallel",),
            vmem_limit_bytes=32 * 1024 * 1024,   # 2x(in+out) 4 MiB buffers
        ),
        cost_estimate=cost,
    )(x2)
    return out2


# ----------------------------------------------------------------------------
# General path: manual-DMA chunked copy (any length, bounded VMEM).
# ----------------------------------------------------------------------------
def _any_copy(x1, total, itemsize, chunk_bytes):
    """Copy a 1-D array of arbitrary length via chunked HBM->VMEM->HBM DMAs."""
    dtype = x1.dtype
    chunk = max(1, min(total, chunk_bytes // itemsize))
    if chunk >= 1024:
        chunk = (chunk // 1024) * 1024           # DMA-friendly alignment
    n_full = total // chunk                      # >= 1
    rem = total - n_full * chunk                 # static remainder (< chunk)

    cost = pl.CostEstimate(flops=0, transcendentals=0,
                           bytes_accessed=2 * total * itemsize)

    def kernel(x_hbm, o_hbm, buf, rbuf, sem):
        i = pl.program_id(0)
        off = i * chunk
        # HBM -> VMEM -> HBM for this chunk.  Chunks are several MiB, so the
        # per-chunk DMA issue/sync latency is a small fraction of transfer
        # time; HBM bandwidth (shared by reads and writes) is the binding
        # resource either way.
        cp_in = pltpu.make_async_copy(x_hbm.at[pl.ds(off, chunk)], buf,
                                      sem.at[0])
        cp_in.start()
        cp_in.wait()
        cp_out = pltpu.make_async_copy(buf, o_hbm.at[pl.ds(off, chunk)],
                                       sem.at[0])
        cp_out.start()
        cp_out.wait()
        if rem > 0:
            @pl.when(i == n_full - 1)
            def _():
                roff = n_full * chunk            # static offset / static size
                r_in = pltpu.make_async_copy(x_hbm.at[pl.ds(roff, rem)], rbuf,
                                             sem.at[1])
                r_in.start()
                r_in.wait()
                r_out = pltpu.make_async_copy(rbuf, o_hbm.at[pl.ds(roff, rem)],
                                              sem.at[1])
                r_out.start()
                r_out.wait()

    return pl.pallas_call(
        kernel,
        out_shape=jax.ShapeDtypeStruct((total,), dtype),
        grid_spec=pltpu.PrefetchScalarGridSpec(
            num_scalar_prefetch=0,
            grid=(n_full,),
            in_specs=[pl.BlockSpec(memory_space=pl.ANY)],   # raw HBM ref
            out_specs=pl.BlockSpec(memory_space=pl.ANY),    # raw HBM ref
            scratch_shapes=[
                pltpu.VMEM((chunk,), dtype),
                pltpu.VMEM((max(rem, 1),), dtype),
                pltpu.SemaphoreType.DMA((2,)),
            ],
        ),
        compiler_params=pltpu.CompilerParams(
            dimension_semantics=("arbitrary",),
            vmem_limit_bytes=32 * 1024 * 1024,
        ),
        cost_estimate=cost,
    )(x1)


# ----------------------------------------------------------------------------
# Wrapper: torch.Tensor.squeeze() semantics (remove all size-1 dims).
# ----------------------------------------------------------------------------
def squeeze(x: jax.Array, *,
            block_bytes: int = _DEFAULT_BLOCK_BYTES,
            chunk_bytes: int = _DEFAULT_BLOCK_BYTES) -> jax.Array:
    out_shape = tuple(d for d in x.shape if d != 1)
    total = int(np.prod(x.shape))
    if total == 0:
        return jnp.reshape(x, out_shape)        # empty: shape change only

    itemsize = jnp.dtype(x.dtype).itemsize
    x1 = jnp.reshape(x, (total,))               # metadata-only flatten

    out = None
    if total % _LANE == 0:
        out = _aligned_copy(x1, total, itemsize, block_bytes)
    if out is None:
        out = _any_copy(x1, total, itemsize, chunk_bytes)
    return jnp.reshape(out, out_shape)


if __name__ == "__main__":
    key = jax.random.PRNGKey(0)
    ks = jax.random.split(key, 6)

    # 1. Primary case: NCHW with a size-1 channel dim (single-block fast path).
    x = jax.random.normal(ks[0], (2, 1, 16, 16), dtype=jnp.float32)
    out = jax.block_until_ready(squeeze(x))
    assert out.shape == (2, 16, 16), out.shape
    np.testing.assert_array_equal(np.asarray(out), np.asarray(jnp.squeeze(x)))

    # 2. Multi-block lane-dense path (grid > 1) via a small block override.
    x2 = jax.random.normal(ks[1], (1, 3, 64, 64), dtype=jnp.float32)
    out2 = jax.block_until_ready(squeeze(x2, block_bytes=16 * 1024))
    assert out2.shape == (3, 64, 64), out2.shape
    np.testing.assert_array_equal(np.asarray(out2), np.asarray(jnp.squeeze(x2)))

    # 3. Dtype-aware block sizing: bf16 goes through the same fast path.
    x3 = jax.random.normal(ks[2], (2, 1, 8, 64), dtype=jnp.bfloat16)
    out3 = jax.block_until_ready(squeeze(x3))
    assert out3.shape == (2, 8, 64), out3.shape
    np.testing.assert_array_equal(np.asarray(out3, dtype=np.float32),
                                  np.asarray(jnp.squeeze(x3), dtype=np.float32))

    # 4. Non-128-divisible element count: general DMA path, single chunk.
    x4 = jax.random.normal(ks[3], (3, 1, 5, 7), dtype=jnp.float32)
    out4 = jax.block_until_ready(squeeze(x4))
    assert out4.shape == (3, 5, 7), out4.shape
    np.testing.assert_array_equal(np.asarray(out4), np.asarray(jnp.squeeze(x4)))

    # 5. General DMA path with multiple chunks + remainder (small chunk
    #    override exercises the code that keeps large unaligned tensors
    #    within bounded VMEM).
    x5 = jax.random.normal(ks[4], (2, 1, 37, 19), dtype=jnp.float32)
    out5 = jax.block_until_ready(squeeze(x5, chunk_bytes=2048))
    assert out5.shape == (2, 37, 19), out5.shape
    np.testing.assert_array_equal(np.asarray(out5), np.asarray(jnp.squeeze(x5)))

    # 6. No size-1 dims: squeeze is a shape no-op, still an exact copy.
    x6 = jax.random.normal(ks[5], (4, 8, 32), dtype=jnp.float32)
    out6 = jax.block_until_ready(squeeze(x6))
    assert out6.shape == (4, 8, 32), out6.shape
    np.testing.assert_array_equal(np.asarray(out6), np.asarray(jnp.squeeze(x6)))

    print("KERNEL_OK")
</pallas_src>

<mosaic_0001>
module attributes {stable_mosaic.version = 11 : i64} {
  func.func @_copy_block_kernel(%arg0: i32, %arg1: memref<4x128xf32, #tpu.memory_space<vmem>>, %arg2: memref<4x128xf32, #tpu.memory_space<vmem>>) attributes {dimension_semantics = [#tpu.dimension_semantics<parallel>], iteration_bounds = array<i64: 1>, scalar_prefetch = 0 : i64, scratch_operands = 0 : i64, tpu.core_type = #tpu.core_type<tc>, window_params = [{transform_indices = @transform_0, window_bounds = array<i64: 4, 128>}, {transform_indices = @transform_1, window_bounds = array<i64: 4, 128>}]} {
    %c0 = arith.constant 0 : index
    %c0_0 = arith.constant 0 : index
    %0 = vector.load %arg1[%c0, %c0_0] : memref<4x128xf32, #tpu.memory_space<vmem>>, vector<4x128xf32>
    %c0_1 = arith.constant 0 : index
    %c0_2 = arith.constant 0 : index
    %1 = vector.load %arg2[%c0_1, %c0_2] : memref<4x128xf32, #tpu.memory_space<vmem>>, vector<4x128xf32>
    tpu.vector_store %arg2[%c0_1, %c0_2], %0 {strides = array<i32>} : memref<4x128xf32, #tpu.memory_space<vmem>>, vector<4x128xf32>,
    return
  }
  func.func @transform_0(%arg0: i32) -> (i32, i32) {
    %c0_i32 = arith.constant 0 : i32
    %c0_i32_0 = arith.constant 0 : i32
    return %arg0, %c0_i32 : i32, i32
  }
  func.func @transform_1(%arg0: i32) -> (i32, i32) {
    %c0_i32 = arith.constant 0 : i32
    %c0_i32_0 = arith.constant 0 : i32
    return %arg0, %c0_i32 : i32, i32
  }
}

</mosaic_0001>

<llo_original>
// kernel: tpu_custom_call.1
$region0: #{tpu_custom_call.1}
  #allocation0 [shape = 'u32[]', space=smem, size = 0x4, offset = 0x4, fixed_abs, tag = 'smem constant byte address 0x4 - core index']
  #allocation1 [shape = 'u32[144,128]{1,0:T(1,128)}', space=vmem, size = 0x12000, scoped, tag = 'internal scratch']
  %s0 = inlined_call_operand.hbm [shape: f32[4,128], index: 0, kind: input, shape index: {}]
  %s1 = inlined_call_operand.hbm [shape: f32[4,128], index: 1, kind: output, shape index: {}]
  %s2 = sld [smem:[#allocation0]]
  $region18: #{tpu_custom_call.1} parent=0
    _
  %s4 = ssub.s32 1, %s2
  %s5 = scalar_select 0, %s4, %s2
  $region1: #{tpu_custom_call.1} parent=0
    #allocation2 [shape = 'u8[2048]{0}', space=vmem, size = 0x800, scoped, tag = 'input window, operand 0, single buffered']
    #allocation3 [shape = 's32[1]{0}', space=sflag, size = 0x4, scoped, tag = 'scoped memory for tpu_custom_call.1']
    #allocation4 [shape = 's32[1]{0}', space=sflag, size = 0x4, scoped, tag = 'scoped memory for tpu_custom_call.1']
    #allocation5 [shape = 'u8[2048]{0}', space=vmem, size = 0x800, scoped, tag = 'output window, operand 0, single buffered']
    %6 = vsyncpa [#allocation3], 0
    %7 = vsyncpa [#allocation4], 0
    // Predicated region
    $region2: #{tpu_custom_call.1} parent=1 // pred_check
      _
    $region3: #{tpu_custom_call.1} parent=1 // pred_check_branch
      %9 = sbr.rel (0) target = $region5
    $region4: #{tpu_custom_call.1} parent=1 // pred_region
      %s11 = ssub.s32 64, 64
      %12 = vsyncadd [#allocation3], %s11
      %s14 = sshll.u32 [#allocation2], 4
      %s15 = int_to_ptr.vmem [resolvable:$true] %s14
      %17 = dma.hbm_to_vmem [thread:$0]  %s0, 64, %s15, [#allocation3]
    $region5: #{tpu_custom_call.1} parent=1 // pred_fallthru
      _
    // Predicated region
    $region6: #{tpu_custom_call.1} parent=1 // pred_check
      _
    $region7: #{tpu_custom_call.1} parent=1 // pred_check_branch
      %19 = sbr.rel (0) target = $region9
    $region8: #{tpu_custom_call.1} parent=1 // pred_region
      %20 = dma.done [#allocation3], 64
    $region9: #{tpu_custom_call.1} parent=1 // pred_fallthru
      _
    %v21 = vld [vmem:[#allocation2] sm:$0xf]
    %22 = vst [vmem:[#allocation5] sm:$0xf] %v21
    // Predicated region
    $region10: #{tpu_custom_call.1} parent=1 // pred_check
      _
    $region11: #{tpu_custom_call.1} parent=1 // pred_check_branch
      %24 = sbr.rel (0) target = $region13
    $region12: #{tpu_custom_call.1} parent=1 // pred_region
      %s26 = ssub.s32 64, 64
      %27 = vsyncadd [#allocation4], %s26
      %s29 = sshll.u32 [#allocation5], 4
      %s30 = int_to_ptr.vmem [resolvable:$true] %s29
      %32 = dma.vmem_to_hbm [thread:$0]  %s30, 64, %s1, [#allocation4]
    $region13: #{tpu_custom_call.1} parent=1 // pred_fallthru
      _
    // Predicated region
    $region14: #{tpu_custom_call.1} parent=1 // pred_check
      _
    $region15: #{tpu_custom_call.1} parent=1 // pred_check_branch
      %34 = sbr.rel (0) target = $region17
    $region16: #{tpu_custom_call.1} parent=1 // pred_region
      %35 = dma.done [#allocation4], 64
    $region17: #{tpu_custom_call.1} parent=1 // pred_fallthru
      _
    %36 = vsyncpa [#allocation3], 1
    %37 = vsyncpa [#allocation4], 1

</llo_original>
